<compile_context>
chip_gen: v6e
topology: v6e:2x2x1
jax: 0.10.0
libtpu: 0.0.40
codegen_flags: <defaults>
</compile_context>

<pallas_src>
import jax
import jax.numpy as jnp
from jax.experimental import pallas as pl
from jax.experimental.pallas import tpu as pltpu

HIDDEN = 256
HEAD_W = 128        # lane-dense fused head width (col 0 = q, col 1 = q_t)
ROW_ALIGN = 16      # batch-tile row alignment (bf16 sublane packing of h1/h2)
MAX_TB = 512        # max batch-tile rows per grid step


# ---------------- kernels ----------------

def _double_q_kernel(obs_ref, act_ref, nobs_ref, nact_ref,
                     w1o_ref, w1a_ref, b1_ref,
                     w2_ref, b2_ref,
                     w3o_ref, w3a_ref, b3_ref,
                     wh2_ref, wh4_ref, bh_ref,
                     out_ref):
    """Full forward (q and q_t): bf16 MXU operands, f32 accumulate, f32 bias/ReLU."""
    bf = jnp.bfloat16

    # fc1 + ReLU; torch.cat([obs, act]) folded into two dots on split weights.
    h1 = (jnp.dot(obs_ref[...].astype(bf), w1o_ref[...], preferred_element_type=jnp.float32)
          + jnp.dot(act_ref[...].astype(bf), w1a_ref[...], preferred_element_type=jnp.float32)
          + b1_ref[...])
    h1 = jnp.maximum(h1, 0.0).astype(bf)                               # (TB, 256)

    # fc2 + ReLU
    h2 = jnp.dot(h1, w2_ref[...], preferred_element_type=jnp.float32) + b2_ref[...]
    h2 = jnp.maximum(h2, 0.0).astype(bf)                               # (TB, 256)

    # fc3 + ReLU on the "next" branch
    h4 = (jnp.dot(nobs_ref[...].astype(bf), w3o_ref[...], preferred_element_type=jnp.float32)
          + jnp.dot(nact_ref[...].astype(bf), w3a_ref[...], preferred_element_type=jnp.float32)
          + b3_ref[...])
    h4 = jnp.maximum(h4, 0.0).astype(bf)                               # (TB, 256)

    # Fused lane-dense heads: col 0 = fc_q(h2), col 1 = fc_qt(cat(h2, h4)),
    # realized as two dots accumulated in f32 (no in-kernel lane concat).
    out_ref[...] = (jnp.dot(h2, wh2_ref[...], preferred_element_type=jnp.float32)
                    + jnp.dot(h4, wh4_ref[...], preferred_element_type=jnp.float32)
                    + bh_ref[...])                                     # (TB, 128) f32


def _q_only_kernel(obs_ref, act_ref,
                   w1o_ref, w1a_ref, b1_ref,
                   w2_ref, b2_ref,
                   wh2_ref, bh_ref,
                   out_ref):
    """q-only specialization: drops the fc3 branch and the wh4 head dot."""
    bf = jnp.bfloat16
    h1 = (jnp.dot(obs_ref[...].astype(bf), w1o_ref[...], preferred_element_type=jnp.float32)
          + jnp.dot(act_ref[...].astype(bf), w1a_ref[...], preferred_element_type=jnp.float32)
          + b1_ref[...])
    h1 = jnp.maximum(h1, 0.0).astype(bf)
    h2 = jnp.dot(h1, w2_ref[...], preferred_element_type=jnp.float32) + b2_ref[...]
    h2 = jnp.maximum(h2, 0.0).astype(bf)
    out_ref[...] = (jnp.dot(h2, wh2_ref[...], preferred_element_type=jnp.float32)
                    + bh_ref[...])


# ---------------- parameter helpers ----------------

def init_double_q_params(key, obs_dim, act_dim):
    """Canonical f32 parameters with the shapes implied by Double_Q.__init__
    (weights stored as (in_features, out_features), biases as (1, out_features))."""
    in_dim = obs_dim + act_dim
    ks = jax.random.split(key, 10)

    def lin(kw, kb, fan_in, fan_out):
        scale = 1.0 / jnp.sqrt(jnp.float32(fan_in))
        w = jax.random.uniform(kw, (fan_in, fan_out), jnp.float32, -scale, scale)
        b = jax.random.uniform(kb, (1, fan_out), jnp.float32, -scale, scale)
        return w, b

    p = {}
    p["w1"], p["b1"] = lin(ks[0], ks[1], in_dim, HIDDEN)       # fc1
    p["w2"], p["b2"] = lin(ks[2], ks[3], HIDDEN, HIDDEN)       # fc2
    p["wq"], p["bq"] = lin(ks[4], ks[5], HIDDEN, 1)            # fc_q
    p["w3"], p["b3"] = lin(ks[6], ks[7], in_dim, HIDDEN)       # fc3
    p["wqt"], p["bqt"] = lin(ks[8], ks[9], 2 * HIDDEN, 1)      # fc_qt
    return p


def pack_double_q_params(params, obs_dim, act_dim):
    """One-time repack into the kernel-ready layout (split first-layer weights,
    bf16 MXU weights, fused lane-dense heads)."""
    del act_dim  # implied by the weight shapes

    wh2 = (jnp.zeros((HIDDEN, HEAD_W), jnp.float32)
           .at[:, 0].set(params["wq"][:, 0])            # q column
           .at[:, 1].set(params["wqt"][:HIDDEN, 0]))    # q_t top half
    wh4 = (jnp.zeros((HIDDEN, HEAD_W), jnp.float32)
           .at[:, 1].set(params["wqt"][HIDDEN:, 0]))    # q_t bottom half
    bh = (jnp.zeros((1, HEAD_W), jnp.float32)
          .at[0, 0].set(params["bq"][0, 0])
          .at[0, 1].set(params["bqt"][0, 0]))

    to_bf = lambda a: jnp.asarray(a, jnp.bfloat16)
    return {
        "w1o": to_bf(params["w1"][:obs_dim]),
        "w1a": to_bf(params["w1"][obs_dim:]),
        "w3o": to_bf(params["w3"][:obs_dim]),
        "w3a": to_bf(params["w3"][obs_dim:]),
        "w2":  to_bf(params["w2"]),
        "wh2": to_bf(wh2),
        "wh4": to_bf(wh4),
        "b1":  params["b1"], "b2": params["b2"], "b3": params["b3"],
        "bh":  bh,
    }


# ---------------- wrapper ----------------

def _round_up(x, m):
    return (x + m - 1) // m * m


def _pad_rows(a, rows):
    return a if a.shape[0] == rows else jnp.pad(a, ((0, rows - a.shape[0]), (0, 0)))


def _const_spec(shape):
    # Weight/bias blocks: full array, constant index_map -> fetched once, resident.
    return pl.BlockSpec(shape, lambda i: (0,) * len(shape))


def double_q_forward(packed, obs_ph, acts, next_obs_ph=None, next_acts=None):
    """Mirrors Double_Q.forward: returns (q_value, q_t); q_t is None when the
    next-state inputs are not supplied (handled at trace time)."""
    obs = jnp.asarray(obs_ph, jnp.float32)
    act = jnp.asarray(acts, jnp.float32)
    B, obs_dim = obs.shape
    act_dim = act.shape[-1]
    in_dim = obs_dim + act_dim
    has_next = next_obs_ph is not None and next_acts is not None

    # Batch tiling: TB rows per grid step (16-row aligned); weights resident.
    TB = min(MAX_TB, _round_up(B, ROW_ALIGN))
    B_pad = _round_up(B, TB)
    grid = (B_pad // TB,)

    obs = _pad_rows(obs, B_pad)
    act = _pad_rows(act, B_pad)

    def row_spec(d):
        return pl.BlockSpec((TB, d), lambda i: (i, 0))

    out_spec = pl.BlockSpec((TB, HEAD_W), lambda i: (i, 0))

    if has_next:
        nobs = _pad_rows(jnp.asarray(next_obs_ph, jnp.float32), B_pad)
        nact = _pad_rows(jnp.asarray(next_acts, jnp.float32), B_pad)
        kernel = _double_q_kernel
        args = (obs, act, nobs, nact,
                packed["w1o"], packed["w1a"], packed["b1"],
                packed["w2"], packed["b2"],
                packed["w3o"], packed["w3a"], packed["b3"],
                packed["wh2"], packed["wh4"], packed["bh"])
        in_specs = ([row_spec(obs_dim), row_spec(act_dim),
                     row_spec(obs_dim), row_spec(act_dim)]
                    + [_const_spec(a.shape) for a in args[4:]])
        flops = 2 * B_pad * (2 * in_dim * HIDDEN + HIDDEN * HIDDEN + 2 * HIDDEN * HEAD_W)
    else:
        kernel = _q_only_kernel
        args = (obs, act,
                packed["w1o"], packed["w1a"], packed["b1"],
                packed["w2"], packed["b2"],
                packed["wh2"], packed["bh"])
        in_specs = ([row_spec(obs_dim), row_spec(act_dim)]
                    + [_const_spec(a.shape) for a in args[2:]])
        flops = 2 * B_pad * (in_dim * HIDDEN + HIDDEN * HIDDEN + HIDDEN * HEAD_W)

    bytes_accessed = (sum(int(a.size) * a.dtype.itemsize for a in args)
                      + B_pad * HEAD_W * 4)

    out = pl.pallas_call(
        kernel,
        out_shape=jax.ShapeDtypeStruct((B_pad, HEAD_W), jnp.float32),
        grid=grid,
        in_specs=in_specs,
        out_specs=out_spec,
        compiler_params=pltpu.CompilerParams(
            dimension_semantics=("parallel",)),
        cost_estimate=pl.CostEstimate(flops=flops, transcendentals=0,
                                      bytes_accessed=bytes_accessed),
    )(*args)

    q_value = out[:B, 0:1]
    q_t = out[:B, 1:2] if has_next else None
    return q_value, q_t


# ---------------- references (pure JAX) ----------------

def _reference_f32(params, obs, acts, nobs, nacts):
    x = jnp.concatenate([obs, acts], axis=-1)
    x1 = jax.nn.relu(x @ params["w1"] + params["b1"])
    x2 = jax.nn.relu(x1 @ params["w2"] + params["b2"])
    q = x2 @ params["wq"] + params["bq"]
    x3 = jnp.concatenate([nobs, nacts], axis=-1)
    x4 = jax.nn.relu(x3 @ params["w3"] + params["b3"])
    x5 = jnp.concatenate([x2, x4], axis=-1)
    qt = x5 @ params["wqt"] + params["bqt"]
    return q, qt


def _reference_bf16(params, obs, acts, nobs, nacts):
    """Emulates the kernel's bf16-operand / f32-accumulate numerics."""
    bf = lambda a: a.astype(jnp.bfloat16).astype(jnp.float32)
    x = bf(jnp.concatenate([obs, acts], axis=-1))
    x1 = bf(jax.nn.relu(x @ bf(params["w1"]) + params["b1"]))
    x2 = bf(jax.nn.relu(x1 @ bf(params["w2"]) + params["b2"]))
    q = x2 @ bf(params["wq"]) + params["bq"]
    x3 = bf(jnp.concatenate([nobs, nacts], axis=-1))
    x4 = bf(jax.nn.relu(x3 @ bf(params["w3"]) + params["b3"]))
    qt = x2 @ bf(params["wqt"][:HIDDEN]) + x4 @ bf(params["wqt"][HIDDEN:]) + params["bqt"]
    return q, qt


if __name__ == "__main__":
    key = jax.random.PRNGKey(0)
    k_param, k_obs, k_act, k_nobs, k_nact = jax.random.split(key, 5)

    B, OBS_DIM, ACT_DIM = 16, 16, 4
    params = init_double_q_params(k_param, OBS_DIM, ACT_DIM)
    packed = pack_double_q_params(params, OBS_DIM, ACT_DIM)

    obs = jax.random.normal(k_obs, (B, OBS_DIM), jnp.float32)
    acts = jax.random.normal(k_act, (B, ACT_DIM), jnp.float32)
    next_obs = jax.random.normal(k_nobs, (B, OBS_DIM), jnp.float32)
    next_acts = jax.random.normal(k_nact, (B, ACT_DIM), jnp.float32)

    # full path: (q, q_t)
    q_value, q_t = double_q_forward(packed, obs, acts, next_obs, next_acts)
    jax.block_until_ready((q_value, q_t))
    assert q_value.shape == (B, 1) and q_t.shape == (B, 1)

    # tight check vs a bf16-emulating reference (same numerics as the kernel)
    q_bf, qt_bf = _reference_bf16(params, obs, acts, next_obs, next_acts)
    assert jnp.allclose(q_value, q_bf, atol=2e-3, rtol=2e-3)
    assert jnp.allclose(q_t, qt_bf, atol=2e-3, rtol=2e-3)

    # loose check vs the full-f32 reference (bf16 weights => ~1e-2 rel error expected)
    q_ref, qt_ref = _reference_f32(params, obs, acts, next_obs, next_acts)
    assert jnp.allclose(q_value, q_ref, atol=6e-2, rtol=6e-2)
    assert jnp.allclose(q_t, qt_ref, atol=6e-2, rtol=6e-2)

    # q-only specialization: q_t must be None (like the PyTorch module), q unchanged
    q_only, none_qt = double_q_forward(packed, obs, acts)
    jax.block_until_ready(q_only)
    assert none_qt is None
    assert jnp.allclose(q_only, q_value, atol=1e-5, rtol=1e-5)

    # ragged batch (exercises the batch-padding path); rows are independent
    q_small, qt_small = double_q_forward(packed, obs[:5], acts[:5],
                                         next_obs[:5], next_acts[:5])
    jax.block_until_ready((q_small, qt_small))
    assert q_small.shape == (5, 1) and qt_small.shape == (5, 1)
    assert jnp.allclose(q_small, q_value[:5], atol=1e-5, rtol=1e-5)
    assert jnp.allclose(qt_small, q_t[:5], atol=1e-5, rtol=1e-5)

    print("KERNEL_OK")
</pallas_src>

<mosaic_0001>
module attributes {stable_mosaic.version = 11 : i64} {
  func.func @_double_q_kernel(%arg0: i32, %arg1: memref<16x16xf32, #tpu.memory_space<vmem>>, %arg2: memref<16x4xf32, #tpu.memory_space<vmem>>, %arg3: memref<16x16xf32, #tpu.memory_space<vmem>>, %arg4: memref<16x4xf32, #tpu.memory_space<vmem>>, %arg5: memref<16x256xbf16, #tpu.memory_space<vmem>>, %arg6: memref<4x256xbf16, #tpu.memory_space<vmem>>, %arg7: memref<1x256xf32, #tpu.memory_space<vmem>>, %arg8: memref<256x256xbf16, #tpu.memory_space<vmem>>, %arg9: memref<1x256xf32, #tpu.memory_space<vmem>>, %arg10: memref<16x256xbf16, #tpu.memory_space<vmem>>, %arg11: memref<4x256xbf16, #tpu.memory_space<vmem>>, %arg12: memref<1x256xf32, #tpu.memory_space<vmem>>, %arg13: memref<256x128xbf16, #tpu.memory_space<vmem>>, %arg14: memref<256x128xbf16, #tpu.memory_space<vmem>>, %arg15: memref<1x128xf32, #tpu.memory_space<vmem>>, %arg16: memref<16x128xf32, #tpu.memory_space<vmem>>) attributes {dimension_semantics = [#tpu.dimension_semantics<parallel>], iteration_bounds = array<i64: 1>, scalar_prefetch = 0 : i64, scratch_operands = 0 : i64, tpu.core_type = #tpu.core_type<tc>, window_params = [{transform_indices = @transform_0, window_bounds = array<i64: 16, 16>}, {transform_indices = @transform_1, window_bounds = array<i64: 16, 4>}, {transform_indices = @transform_2, window_bounds = array<i64: 16, 16>}, {transform_indices = @transform_3, window_bounds = array<i64: 16, 4>}, {pipeline_mode = #tpu.pipeline_mode<synchronous>, transform_indices = @transform_4, window_bounds = array<i64: 16, 256>}, {pipeline_mode = #tpu.pipeline_mode<synchronous>, transform_indices = @transform_5, window_bounds = array<i64: 4, 256>}, {pipeline_mode = #tpu.pipeline_mode<synchronous>, transform_indices = @transform_6, window_bounds = array<i64: 1, 256>}, {pipeline_mode = #tpu.pipeline_mode<synchronous>, transform_indices = @transform_7, window_bounds = array<i64: 256, 256>}, {pipeline_mode = #tpu.pipeline_mode<synchronous>, transform_indices = @transform_8, window_bounds = array<i64: 1, 256>}, {pipeline_mode = #tpu.pipeline_mode<synchronous>, transform_indices = @transform_9, window_bounds = array<i64: 16, 256>}, {pipeline_mode = #tpu.pipeline_mode<synchronous>, transform_indices = @transform_10, window_bounds = array<i64: 4, 256>}, {pipeline_mode = #tpu.pipeline_mode<synchronous>, transform_indices = @transform_11, window_bounds = array<i64: 1, 256>}, {pipeline_mode = #tpu.pipeline_mode<synchronous>, transform_indices = @transform_12, window_bounds = array<i64: 256, 128>}, {pipeline_mode = #tpu.pipeline_mode<synchronous>, transform_indices = @transform_13, window_bounds = array<i64: 256, 128>}, {pipeline_mode = #tpu.pipeline_mode<synchronous>, transform_indices = @transform_14, window_bounds = array<i64: 1, 128>}, {transform_indices = @transform_15, window_bounds = array<i64: 16, 128>}]} {
    %c0 = arith.constant 0 : index
    %c0_0 = arith.constant 0 : index
    %0 = vector.load %arg1[%c0, %c0_0] : memref<16x16xf32, #tpu.memory_space<vmem>>, vector<16x16xf32>
    %1 = arith.truncf %0 : vector<16x16xf32> to vector<16x16xbf16>
    %c0_1 = arith.constant 0 : index
    %c0_2 = arith.constant 0 : index
    %2 = vector.load %arg5[%c0_1, %c0_2] : memref<16x256xbf16, #tpu.memory_space<vmem>>, vector<16x256xbf16>
    %cst = arith.constant dense<0.000000e+00> : vector<16x256xf32>
    %3 = tpu.matmul %1, %2, %cst {dimension_numbers = #tpu.dot_dimension_numbers<[1], [0], [0], [1], [0, 0, 1, 1], [], []>} : vector<16x16xbf16>, vector<16x256xbf16>, vector<16x256xf32> -> vector<16x256xf32>
    %c0_3 = arith.constant 0 : index
    %c0_4 = arith.constant 0 : index
    %4 = vector.load %arg2[%c0_3, %c0_4] : memref<16x4xf32, #tpu.memory_space<vmem>>, vector<16x4xf32>
    %5 = arith.truncf %4 : vector<16x4xf32> to vector<16x4xbf16>
    %c0_5 = arith.constant 0 : index
    %c0_6 = arith.constant 0 : index
    %6 = vector.load %arg6[%c0_5, %c0_6] : memref<4x256xbf16, #tpu.memory_space<vmem>>, vector<4x256xbf16>
    %cst_7 = arith.constant dense<0.000000e+00> : vector<16x256xf32>
    %7 = tpu.matmul %5, %6, %cst_7 {dimension_numbers = #tpu.dot_dimension_numbers<[1], [0], [0], [1], [0, 0, 1, 1], [], []>} : vector<16x4xbf16>, vector<4x256xbf16>, vector<16x256xf32> -> vector<16x256xf32>
    %8 = arith.addf %3, %7 : vector<16x256xf32>
    %c0_8 = arith.constant 0 : index
    %c0_9 = arith.constant 0 : index
    %9 = vector.load %arg7[%c0_8, %c0_9] : memref<1x256xf32, #tpu.memory_space<vmem>>, vector<1x256xf32>
    %10 = vector.broadcast %9 : vector<1x256xf32> to vector<16x256xf32>
    %11 = arith.addf %8, %10 : vector<16x256xf32>
    %cst_10 = arith.constant 0.000000e+00 : f32
    %12 = vector.broadcast %cst_10 : f32 to vector<16x256xf32>
    %13 = arith.maximumf %11, %12 : vector<16x256xf32>
    %14 = arith.truncf %13 : vector<16x256xf32> to vector<16x256xbf16>
    %c0_11 = arith.constant 0 : index
    %c0_12 = arith.constant 0 : index
    %15 = vector.load %arg8[%c0_11, %c0_12] : memref<256x256xbf16, #tpu.memory_space<vmem>>, vector<256x256xbf16>
    %cst_13 = arith.constant dense<0.000000e+00> : vector<16x256xf32>
    %16 = tpu.matmul %14, %15, %cst_13 {dimension_numbers = #tpu.dot_dimension_numbers<[1], [0], [0], [1], [0, 0, 1, 1], [], []>} : vector<16x256xbf16>, vector<256x256xbf16>, vector<16x256xf32> -> vector<16x256xf32>
    %c0_14 = arith.constant 0 : index
    %c0_15 = arith.constant 0 : index
    %17 = vector.load %arg9[%c0_14, %c0_15] : memref<1x256xf32, #tpu.memory_space<vmem>>, vector<1x256xf32>
    %18 = vector.broadcast %17 : vector<1x256xf32> to vector<16x256xf32>
    %19 = arith.addf %16, %18 : vector<16x256xf32>
    %cst_16 = arith.constant 0.000000e+00 : f32
    %20 = vector.broadcast %cst_16 : f32 to vector<16x256xf32>
    %21 = arith.maximumf %19, %20 : vector<16x256xf32>
    %22 = arith.truncf %21 : vector<16x256xf32> to vector<16x256xbf16>
    %c0_17 = arith.constant 0 : index
    %c0_18 = arith.constant 0 : index
    %23 = vector.load %arg3[%c0_17, %c0_18] : memref<16x16xf32, #tpu.memory_space<vmem>>, vector<16x16xf32>
    %24 = arith.truncf %23 : vector<16x16xf32> to vector<16x16xbf16>
    %c0_19 = arith.constant 0 : index
    %c0_20 = arith.constant 0 : index
    %25 = vector.load %arg10[%c0_19, %c0_20] : memref<16x256xbf16, #tpu.memory_space<vmem>>, vector<16x256xbf16>
    %cst_21 = arith.constant dense<0.000000e+00> : vector<16x256xf32>
    %26 = tpu.matmul %24, %25, %cst_21 {dimension_numbers = #tpu.dot_dimension_numbers<[1], [0], [0], [1], [0, 0, 1, 1], [], []>} : vector<16x16xbf16>, vector<16x256xbf16>, vector<16x256xf32> -> vector<16x256xf32>
    %c0_22 = arith.constant 0 : index
    %c0_23 = arith.constant 0 : index
    %27 = vector.load %arg4[%c0_22, %c0_23] : memref<16x4xf32, #tpu.memory_space<vmem>>, vector<16x4xf32>
    %28 = arith.truncf %27 : vector<16x4xf32> to vector<16x4xbf16>
    %c0_24 = arith.constant 0 : index
    %c0_25 = arith.constant 0 : index
    %29 = vector.load %arg11[%c0_24, %c0_25] : memref<4x256xbf16, #tpu.memory_space<vmem>>, vector<4x256xbf16>
    %cst_26 = arith.constant dense<0.000000e+00> : vector<16x256xf32>
    %30 = tpu.matmul %28, %29, %cst_26 {dimension_numbers = #tpu.dot_dimension_numbers<[1], [0], [0], [1], [0, 0, 1, 1], [], []>} : vector<16x4xbf16>, vector<4x256xbf16>, vector<16x256xf32> -> vector<16x256xf32>
    %31 = arith.addf %26, %30 : vector<16x256xf32>
    %c0_27 = arith.constant 0 : index
    %c0_28 = arith.constant 0 : index
    %32 = vector.load %arg12[%c0_27, %c0_28] : memref<1x256xf32, #tpu.memory_space<vmem>>, vector<1x256xf32>
    %33 = vector.broadcast %32 : vector<1x256xf32> to vector<16x256xf32>
    %34 = arith.addf %31, %33 : vector<16x256xf32>
    %cst_29 = arith.constant 0.000000e+00 : f32
    %35 = vector.broadcast %cst_29 : f32 to vector<16x256xf32>
    %36 = arith.maximumf %34, %35 : vector<16x256xf32>
    %37 = arith.truncf %36 : vector<16x256xf32> to vector<16x256xbf16>
    %c0_30 = arith.constant 0 : index
    %c0_31 = arith.constant 0 : index
    %38 = vector.load %arg13[%c0_30, %c0_31] : memref<256x128xbf16, #tpu.memory_space<vmem>>, vector<256x128xbf16>
    %cst_32 = arith.constant dense<0.000000e+00> : vector<16x128xf32>
    %39 = tpu.matmul %22, %38, %cst_32 {dimension_numbers = #tpu.dot_dimension_numbers<[1], [0], [0], [1], [0, 0, 1, 1], [], []>} : vector<16x256xbf16>, vector<256x128xbf16>, vector<16x128xf32> -> vector<16x128xf32>
    %c0_33 = arith.constant 0 : index
    %c0_34 = arith.constant 0 : index
    %40 = vector.load %arg14[%c0_33, %c0_34] : memref<256x128xbf16, #tpu.memory_space<vmem>>, vector<256x128xbf16>
    %cst_35 = arith.constant dense<0.000000e+00> : vector<16x128xf32>
    %41 = tpu.matmul %37, %40, %cst_35 {dimension_numbers = #tpu.dot_dimension_numbers<[1], [0], [0], [1], [0, 0, 1, 1], [], []>} : vector<16x256xbf16>, vector<256x128xbf16>, vector<16x128xf32> -> vector<16x128xf32>
    %42 = arith.addf %39, %41 : vector<16x128xf32>
    %c0_36 = arith.constant 0 : index
    %c0_37 = arith.constant 0 : index
    %43 = vector.load %arg15[%c0_36, %c0_37] : memref<1x128xf32, #tpu.memory_space<vmem>>, vector<1x128xf32>
    %44 = vector.broadcast %43 : vector<1x128xf32> to vector<16x128xf32>
    %45 = arith.addf %42, %44 : vector<16x128xf32>
    %c0_38 = arith.constant 0 : index
    %c0_39 = arith.constant 0 : index
    %46 = vector.load %arg16[%c0_38, %c0_39] : memref<16x128xf32, #tpu.memory_space<vmem>>, vector<16x128xf32>
    tpu.vector_store %arg16[%c0_38, %c0_39], %45 {strides = array<i32>} : memref<16x128xf32, #tpu.memory_space<vmem>>, vector<16x128xf32>,
    return
  }
  func.func @transform_0(%arg0: i32) -> (i32, i32) {
    %c0_i32 = arith.constant 0 : i32
    %c0_i32_0 = arith.constant 0 : i32
    return %arg0, %c0_i32 : i32, i32
  }
  func.func @transform_1(%arg0: i32) -> (i32, i32) {
    %c0_i32 = arith.constant 0 : i32
    %c0_i32_0 = arith.constant 0 : i32
    return %arg0, %c0_i32 : i32, i32
  }
  func.func @transform_2(%arg0: i32) -> (i32, i32) {
    %c0_i32 = arith.constant 0 : i32
    %c0_i32_0 = arith.constant 0 : i32
    return %arg0, %c0_i32 : i32, i32
  }
  func.func @transform_3(%arg0: i32) -> (i32, i32) {
    %c0_i32 = arith.constant 0 : i32
    %c0_i32_0 = arith.constant 0 : i32
    return %arg0, %c0_i32 : i32, i32
  }
  func.func @transform_4(%arg0: i32) -> (i32, i32) {
    %c0_i32 = arith.constant 0 : i32
    %c0_i32_0 = arith.constant 0 : i32
    %c0_i32_1 = arith.constant 0 : i32
    return %c0_i32, %c0_i32_0 : i32, i32
  }
  func.func @transform_5(%arg0: i32) -> (i32, i32) {
    %c0_i32 = arith.constant 0 : i32
    %c0_i32_0 = arith.constant 0 : i32
    %c0_i32_1 = arith.constant 0 : i32
    return %c0_i32, %c0_i32_0 : i32, i32
  }
  func.func @transform_6(%arg0: i32) -> (i32, i32) {
    %c0_i32 = arith.constant 0 : i32
    %c0_i32_0 = arith.constant 0 : i32
    %c0_i32_1 = arith.constant 0 : i32
    return %c0_i32, %c0_i32_0 : i32, i32
  }
  func.func @transform_7(%arg0: i32) -> (i32, i32) {
    %c0_i32 = arith.constant 0 : i32
    %c0_i32_0 = arith.constant 0 : i32
    %c0_i32_1 = arith.constant 0 : i32
    return %c0_i32, %c0_i32_0 : i32, i32
  }
  func.func @transform_8(%arg0: i32) -> (i32, i32) {
    %c0_i32 = arith.constant 0 : i32
    %c0_i32_0 = arith.constant 0 : i32
    %c0_i32_1 = arith.constant 0 : i32
    return %c0_i32, %c0_i32_0 : i32, i32
  }
  func.func @transform_9(%arg0: i32) -> (i32, i32) {
    %c0_i32 = arith.constant 0 : i32
    %c0_i32_0 = arith.constant 0 : i32
    %c0_i32_1 = arith.constant 0 : i32
    return %c0_i32, %c0_i32_0 : i32, i32
  }
  func.func @transform_10(%arg0: i32) -> (i32, i32) {
    %c0_i32 = arith.constant 0 : i32
    %c0_i32_0 = arith.constant 0 : i32
    %c0_i32_1 = arith.constant 0 : i32
    return %c0_i32, %c0_i32_0 : i32, i32
  }
  func.func @transform_11(%arg0: i32) -> (i32, i32) {
    %c0_i32 = arith.constant 0 : i32
    %c0_i32_0 = arith.constant 0 : i32
    %c0_i32_1 = arith.constant 0 : i32
    return %c0_i32, %c0_i32_0 : i32, i32
  }
  func.func @transform_12(%arg0: i32) -> (i32, i32) {
    %c0_i32 = arith.constant 0 : i32
    %c0_i32_0 = arith.constant 0 : i32
    %c0_i32_1 = arith.constant 0 : i32
    return %c0_i32, %c0_i32_0 : i32, i32
  }
  func.func @transform_13(%arg0: i32) -> (i32, i32) {
    %c0_i32 = arith.constant 0 : i32
    %c0_i32_0 = arith.constant 0 : i32
    %c0_i32_1 = arith.constant 0 : i32
    return %c0_i32, %c0_i32_0 : i32, i32
  }
  func.func @transform_14(%arg0: i32) -> (i32, i32) {
    %c0_i32 = arith.constant 0 : i32
    %c0_i32_0 = arith.constant 0 : i32
    %c0_i32_1 = arith.constant 0 : i32
    return %c0_i32, %c0_i32_0 : i32, i32
  }
  func.func @transform_15(%arg0: i32) -> (i32, i32) {
    %c0_i32 = arith.constant 0 : i32
    %c0_i32_0 = arith.constant 0 : i32
    return %arg0, %c0_i32 : i32, i32
  }
}

</mosaic_0001>

<llo_original>
// kernel: tpu_custom_call.1
$region0: #{tpu_custom_call.1}
  #allocation0 [shape = 'u32[]', space=smem, size = 0x4, offset = 0x4, fixed_abs, tag = 'smem constant byte address 0x4 - core index']
  #allocation1 [shape = 'u32[144,128]{1,0:T(1,128)}', space=vmem, size = 0x12000, scoped, tag = 'internal scratch']
  %s0 = inlined_call_operand.vmem [shape: f32[16,16], index: 0, kind: input, shape index: {}]
  %s1 = inlined_call_operand.vmem [shape: f32[16,4], index: 1, kind: input, shape index: {}]
  %s2 = inlined_call_operand.vmem [shape: f32[16,16], index: 2, kind: input, shape index: {}]
  %s3 = inlined_call_operand.vmem [shape: f32[16,4], index: 3, kind: input, shape index: {}]
  %s4 = inlined_call_operand.hbm [shape: bf16[16,256], index: 4, kind: input, shape index: {}]
  %s5 = inlined_call_operand.hbm [shape: bf16[4,256], index: 5, kind: input, shape index: {}]
  %s6 = inlined_call_operand.hbm [shape: f32[1,256], index: 6, kind: input, shape index: {}]
  %s7 = inlined_call_operand.hbm [shape: bf16[256,256], index: 7, kind: input, shape index: {}]
  %s8 = inlined_call_operand.vmem [shape: f32[1,256], index: 8, kind: input, shape index: {}]
  %s9 = inlined_call_operand.vmem [shape: bf16[16,256], index: 9, kind: input, shape index: {}]
  %s10 = inlined_call_operand.vmem [shape: bf16[4,256], index: 10, kind: input, shape index: {}]
  %s11 = inlined_call_operand.vmem [shape: f32[1,256], index: 11, kind: input, shape index: {}]
  %s12 = inlined_call_operand.hbm [shape: bf16[256,128], index: 12, kind: input, shape index: {}]
  %s13 = inlined_call_operand.hbm [shape: bf16[256,128], index: 13, kind: input, shape index: {}]
  %s14 = inlined_call_operand.vmem [shape: f32[1,128], index: 14, kind: input, shape index: {}]
  %s15 = inlined_call_operand.hbm [shape: f32[16,128], index: 15, kind: output, shape index: {}]
  %s16 = sld [smem:[#allocation0]]
  $region94: #{tpu_custom_call.1} parent=0
    _
  %s18 = ssub.s32 1, %s16
  %s19 = scalar_select 0, %s18, %s16
  $region1: #{tpu_custom_call.1} parent=0
    #allocation2 [shape = 'u8[8192]{0}', space=vmem, size = 0x2000, scoped, tag = 'input window, operand 4, single buffered']
    #allocation3 [shape = 's32[1]{0}', space=sflag, size = 0x4, scoped, tag = 'scoped memory for tpu_custom_call.1']
    #allocation4 [shape = 's32[1]{0}', space=sflag, size = 0x4, scoped, tag = 'scoped memory for tpu_custom_call.1']
    #allocation5 [shape = 'u8[2048]{0}', space=vmem, size = 0x800, scoped, tag = 'input window, operand 5, single buffered']
    #allocation6 [shape = 's32[1]{0}', space=sflag, size = 0x4, scoped, tag = 'scoped memory for tpu_custom_call.1']
    #allocation7 [shape = 'u8[1024]{0}', space=vmem, size = 0x400, scoped, tag = 'input window, operand 6, single buffered']
    #allocation8 [shape = 'u8[131072]{0}', space=vmem, size = 0x20000, scoped, tag = 'input window, operand 7, single buffered']
    #allocation9 [shape = 's32[1]{0}', space=sflag, size = 0x4, scoped, tag = 'scoped memory for tpu_custom_call.1']
    #allocation10 [shape = 'u8[65536]{0}', space=vmem, size = 0x10000, scoped, tag = 'input window, operand 12, single buffered']
    #allocation11 [shape = 'u8[65536]{0}', space=vmem, size = 0x10000, scoped, tag = 'input window, operand 13, single buffered']
    #allocation12 [shape = 's32[1]{0}', space=sflag, size = 0x4, scoped, tag = 'scoped memory for tpu_custom_call.1']
    #allocation13 [shape = 'u8[8192]{0}', space=vmem, size = 0x2000, scoped, tag = 'output window, operand 0, single buffered']
    %20 = vsyncpa [#allocation3], 0
    %21 = vsyncpa [#allocation6], 0
    %22 = vsyncpa [#allocation9], 0
    %23 = vsyncpa [#allocation12], 0
    %24 = vsyncpa [#allocation4], 0
    // Predicated region
    $region2: #{tpu_custom_call.1} parent=1 // pred_check
      _
    $region3: #{tpu_custom_call.1} parent=1 // pred_check_branch
      %26 = sbr.rel (0) target = $region5
    $region4: #{tpu_custom_call.1} parent=1 // pred_region
      _
    $region5: #{tpu_custom_call.1} parent=1 // pred_fallthru
      _
    // Predicated region
    $region6: #{tpu_custom_call.1} parent=1 // pred_check
      _
    $region7: #{tpu_custom_call.1} parent=1 // pred_check_branch
      %28 = sbr.rel (0) target = $region9
    $region8: #{tpu_custom_call.1} parent=1 // pred_region
      _
    $region9: #{tpu_custom_call.1} parent=1 // pred_fallthru
      _
    // Predicated region
    $region10: #{tpu_custom_call.1} parent=1 // pred_check
      _
    $region11: #{tpu_custom_call.1} parent=1 // pred_check_branch
      %30 = sbr.rel (0) target = $region13
    $region12: #{tpu_custom_call.1} parent=1 // pred_region
      _
    $region13: #{tpu_custom_call.1} parent=1 // pred_fallthru
      _
    // Predicated region
    $region14: #{tpu_custom_call.1} parent=1 // pred_check
      _
    $region15: #{tpu_custom_call.1} parent=1 // pred_check_branch
      %32 = sbr.rel (0) target = $region17
    $region16: #{tpu_custom_call.1} parent=1 // pred_region
      _
    $region17: #{tpu_custom_call.1} parent=1 // pred_fallthru
      _
    // Predicated region
    $region18: #{tpu_custom_call.1} parent=1 // pred_check
      _
    $region19: #{tpu_custom_call.1} parent=1 // pred_check_branch
      %34 = sbr.rel (0) target = $region21
    $region20: #{tpu_custom_call.1} parent=1 // pred_region
      %s36 = ssub.s32 256, 256
      %37 = vsyncadd [#allocation3], %s36
      %s38 = sshll.u32 [#allocation2], 4
      %s39 = int_to_ptr.vmem [resolvable:$true] %s38
      %44 = dma.hbm_to_vmem [thread:$0]  %s4, 256, %s39, [#allocation3], 128, 128, 8
    $region21: #{tpu_custom_call.1} parent=1 // pred_fallthru
      _
    // Predicated region
    $region22: #{tpu_custom_call.1} parent=1 // pred_check
      _
    $region23: #{tpu_custom_call.1} parent=1 // pred_check_branch
      %46 = sbr.rel (0) target = $region25
    $region24: #{tpu_custom_call.1} parent=1 // pred_region
      %s48 = ssub.s32 64, 64
      %49 = vsyncadd [#allocation6], %s48
      %s51 = sshll.u32 [#allocation5], 4
      %s52 = int_to_ptr.vmem [resolvable:$true] %s51
      %54 = dma.hbm_to_vmem [thread:$0]  %s5, 64, %s52, [#allocation6]
    $region25: #{tpu_custom_call.1} parent=1 // pred_fallthru
      _
    // Predicated region
    $region26: #{tpu_custom_call.1} parent=1 // pred_check
      _
    $region27: #{tpu_custom_call.1} parent=1 // pred_check_branch
      %56 = sbr.rel (0) target = $region29
    $region28: #{tpu_custom_call.1} parent=1 // pred_region
      %s58 = ssub.s32 32, 32
      %59 = vsyncadd [#allocation6], %s58
      %s61 = sshll.u32 [#allocation7], 4
      %s62 = int_to_ptr.vmem [resolvable:$true] %s61
      %64 = dma.hbm_to_vmem [thread:$0]  %s6, 32, %s62, [#allocation6]
    $region29: #{tpu_custom_call.1} parent=1 // pred_fallthru
      _
    // Predicated region
    $region30: #{tpu_custom_call.1} parent=1 // pred_check
      _
    $region31: #{tpu_custom_call.1} parent=1 // pred_check_branch
      %66 = sbr.rel (0) target = $region33
    $region32: #{tpu_custom_call.1} parent=1 // pred_region
      %s68 = ssub.s32 4096, 4096
      %69 = vsyncadd [#allocation9], %s68
      %s70 = sshll.u32 [#allocation8], 4
      %s71 = int_to_ptr.vmem [resolvable:$true] %s70
      %76 = dma.hbm_to_vmem [thread:$0]  %s7, 4096, %s71, [#allocation9], 128, 128, 8
    $region33: #{tpu_custom_call.1} parent=1 // pred_fallthru
      _
    // Predicated region
    $region34: #{tpu_custom_call.1} parent=1 // pred_check
      _
    $region35: #{tpu_custom_call.1} parent=1 // pred_check_branch
      %78 = sbr.rel (0) target = $region37
    $region36: #{tpu_custom_call.1} parent=1 // pred_region
      _
    $region37: #{tpu_custom_call.1} parent=1 // pred_fallthru
      _
    // Predicated region
    $region38: #{tpu_custom_call.1} parent=1 // pred_check
      _
    $region39: #{tpu_custom_call.1} parent=1 // pred_check_branch
      %80 = sbr.rel (0) target = $region41
    $region40: #{tpu_custom_call.1} parent=1 // pred_region
      _
    $region41: #{tpu_custom_call.1} parent=1 // pred_fallthru
      _
    // Predicated region
    $region42: #{tpu_custom_call.1} parent=1 // pred_check
      _
    $region43: #{tpu_custom_call.1} parent=1 // pred_check_branch
      %82 = sbr.rel (0) target = $region45
    $region44: #{tpu_custom_call.1} parent=1 // pred_region
      _
    $region45: #{tpu_custom_call.1} parent=1 // pred_fallthru
      _
    // Predicated region
    $region46: #{tpu_custom_call.1} parent=1 // pred_check
      _
    $region47: #{tpu_custom_call.1} parent=1 // pred_check_branch
      %84 = sbr.rel (0) target = $region49
    $region48: #{tpu_custom_call.1} parent=1 // pred_region
      _
    $region49: #{tpu_custom_call.1} parent=1 // pred_fallthru
      _
    // Predicated region
    $region50: #{tpu_custom_call.1} parent=1 // pred_check
      _
    $region51: #{tpu_custom_call.1} parent=1 // pred_check_branch
      %86 = sbr.rel (0) target = $region53
    $region52: #{tpu_custom_call.1} parent=1 // pred_region
      %s88 = ssub.s32 2048, 2048
      %89 = vsyncadd [#allocation9], %s88
      %s90 = sshll.u32 [#allocation10], 4
      %s91 = int_to_ptr.vmem [resolvable:$true] %s90
      %96 = dma.hbm_to_vmem [thread:$0]  %s12, 2048, %s91, [#allocation9], 64, 64, 4
    $region53: #{tpu_custom_call.1} parent=1 // pred_fallthru
      _
    // Predicated region
    $region54: #{tpu_custom_call.1} parent=1 // pred_check
      _
    $region55: #{tpu_custom_call.1} parent=1 // pred_check_branch
      %98 = sbr.rel (0) target = $region57
    $region56: #{tpu_custom_call.1} parent=1 // pred_region
      %s100 = ssub.s32 2048, 2048
      %101 = vsyncadd [#allocation12], %s100
      %s102 = sshll.u32 [#allocation11], 4
      %s103 = int_to_ptr.vmem [resolvable:$true] %s102
      %108 = dma.hbm_to_vmem [thread:$0]  %s13, 2048, %s103, [#allocation12], 64, 64, 4
    $region57: #{tpu_custom_call.1} parent=1 // pred_fallthru
      _
    // Predicated region
    $region58: #{tpu_custom_call.1} parent=1 // pred_check
      _
    $region59: #{tpu_custom_call.1} parent=1 // pred_check_branch
      %110 = sbr.rel (0) target = $region61
    $region60: #{tpu_custom_call.1} parent=1 // pred_region
      _
    $region61: #{tpu_custom_call.1} parent=1 // pred_fallthru
      _
    // Predicated region
    $region62: #{tpu_custom_call.1} parent=1 // pred_check
      _
    $region63: #{tpu_custom_call.1} parent=1 // pred_check_branch
      %112 = sbr.rel (0) target = $region65
    $region64: #{tpu_custom_call.1} parent=1 // pred_region
      %113 = dma.done [#allocation3], 256
    $region65: #{tpu_custom_call.1} parent=1 // pred_fallthru
      _
    // Predicated region
    $region66: #{tpu_custom_call.1} parent=1 // pred_check
      _
    $region67: #{tpu_custom_call.1} parent=1 // pred_check_branch
      %115 = sbr.rel (0) target = $region69
    $region68: #{tpu_custom_call.1} parent=1 // pred_region
      %116 = dma.done [#allocation6], 64
    $region69: #{tpu_custom_call.1} parent=1 // pred_fallthru
      _
    // Predicated region
    $region70: #{tpu_custom_call.1} parent=1 // pred_check
      _
    $region71: #{tpu_custom_call.1} parent=1 // pred_check_branch
      %118 = sbr.rel (0) target = $region73
    $region72: #{tpu_custom_call.1} parent=1 // pred_region
      %119 = dma.done [#allocation6], 32
    $region73: #{tpu_custom_call.1} parent=1 // pred_fallthru
      _
    // Predicated region
    $region74: #{tpu_custom_call.1} parent=1 // pred_check
      _
    $region75: #{tpu_custom_call.1} parent=1 // pred_check_branch
      %121 = sbr.rel (0) target = $region77
    $region76: #{tpu_custom_call.1} parent=1 // pred_region
      %122 = dma.done [#allocation9], 4096
    $region77: #{tpu_custom_call.1} parent=1 // pred_fallthru
      _
    // Predicated region
    $region78: #{tpu_custom_call.1} parent=1 // pred_check
      _
    $region79: #{tpu_custom_call.1} parent=1 // pred_check_branch
      %124 = sbr.rel (0) target = $region81
    $region80: #{tpu_custom_call.1} parent=1 // pred_region
      %125 = dma.done [#allocation9], 2048
    $region81: #{tpu_custom_call.1} parent=1 // pred_fallthru
      _
    // Predicated region
    $region82: #{tpu_custom_call.1} parent=1 // pred_check
      _
    $region83: #{tpu_custom_call.1} parent=1 // pred_check_branch
      %127 = sbr.rel (0) target = $region85
    $region84: #{tpu_custom_call.1} parent=1 // pred_region
      %128 = dma.done [#allocation12], 2048
    $region85: #{tpu_custom_call.1} parent=1 // pred_fallthru
      _
    %v130 = vld [vmem:[%s0] sm:$0xff]
    %v131 = vld [vmem:[%s0 + $0x8] sm:$0xff]
    %v132 = vpack.c.bf16 %v131, %v130
    %v133 = vld [vmem:[#allocation2] sm:$0xff]
    %v134 = vld [vmem:[#allocation2 + $0x8] sm:$0xff]
    %v135 = vld [vmem:[%s1] sm:$0xff]
    %v136 = vld [vmem:[%s1 + $0x8] sm:$0xff]
    %v137 = vpack.c.bf16 %v136, %v135
    %v138 = vld [vmem:[#allocation5] sm:$0xf]
    %v141 = vunpack.c.l.s4 1983009808
    %v142 = vunpack.c.0.s8 %v141
    %v143 = vlaneseq
    %v144 = vshrl.u32 %v143, 7
    %v145 = vsub.s32 %v142, %v144
    %v146 = vrot.slane %v138, %v145
    %v147 = vcombine.high %v146, %v146
    %vm148 = vcmask 31744
    %v150 = vsel %vm148, %v137, 0
    %vm152 = vcmask 1041408
    %v154 = vsel %vm152, %v146, 0
    %v157 = vsel %vm152, %v147, 0
    %159 = vmatprep.subr.bf16.mxu0 0
    %160 = vmatpush1.bf16.msra.mxu0 0
    %161 = vmatprep.subr.bf16.mxu0 0
    %162 = vmatpush1.bf16.msra.mxu0 0
    %163 = vmatprep.subr.bf16.mxu0 0
    %164 = vmatpush1.bf16.msra.mxu0 0
    %165 = vmatprep.subr.bf16.mxu0 0
    %166 = vmatpush1.bf16.msra.mxu0 0
    %167 = vmatprep.subr.bf16.mxu0 0
    %168 = vmatpush1.bf16.msra.mxu0 0
    %169 = vmatprep.subr.bf16.mxu0 0
    %170 = vmatpush1.bf16.msra.mxu0 0
    %171 = vmatprep.subr.bf16.mxu0 0
    %172 = vmatpush1.bf16.msra.mxu0 0
    %173 = vmatprep.subr.bf16.mxu0 %v157
    %174 = vmatpush1.bf16.msra.mxu0 %v154
    %175 = vmatprep.subr.bf16.mxu0 0
    %176 = vmatpush2.bf16.msra.mxu0 0
    %177 = vmatprep.subr.bf16.mxu0 0
    %178 = vmatpush2.bf16.msra.mxu0 0
    %179 = vmatprep.subr.bf16.mxu0 0
    %180 = vmatpush2.bf16.msra.mxu0 0
    %181 = vmatprep.subr.bf16.mxu0 0
    %182 = vmatpush2.bf16.msra.mxu0 0
    %183 = vmatprep.subr.bf16.mxu0 0
    %184 = vmatpush2.bf16.msra.mxu0 0
    %185 = vmatprep.subr.bf16.mxu0 0
    %186 = vmatpush2.bf16.msra.mxu0 0
    %187 = vmatprep.subr.bf16.mxu0 0
    %188 = vmatpush2.bf16.msra.mxu0 0
    %189 = vmatprep.subr.bf16.mxu0 0
    %190 = vmatpush2.bf16.msra.mxu0 0
    %191 = vmatprep.mubr.bf16.mxu0 0
    %192 = vmatmul.mubr.bf16.gmra.mxu0 %v150
    %v193 = vpop.f32.mrf.mxu0
    %v194 = vadd.f32 0.0, %v193
    %v195 = vpop.f32.mrf.mxu0
    %v196 = vadd.f32 0.0, %v195
    %v197 = vpop.f32.mrf.mxu0
    %v198 = vadd.f32 0.0, %v197
    %v199 = vpop.f32.mrf.mxu0
    %v200 = vadd.f32 0.0, %v199
    %201 = vdwg.mxu0
    %v204 = vunpack.c.l.b16 %v133
    %v205 = vunpack.c.h.b16 %v133
    %v206 = vunpack.c.l.b16 %v134
    %v207 = vunpack.c.h.b16 %v134
    %v208 = vpack.c.b16 %v206, %v204
    %v209 = vpack.c.b16 %v207, %v205
    %vm212 = vcmask 130048
    %v214 = vsel %vm212, %v132, 0
    %216 = vmatprep.subr.bf16.mxu0 0
    %217 = vmatpush1.bf16.msra.mxu0 0
    %218 = vmatprep.subr.bf16.mxu0 0
    %219 = vmatpush1.bf16.msra.mxu0 0
    %220 = vmatprep.subr.bf16.mxu0 0
    %221 = vmatpush1.bf16.msra.mxu0 0
    %222 = vmatprep.subr.bf16.mxu0 0
    %223 = vmatpush1.bf16.msra.mxu0 0
    %224 = vmatprep.subr.bf16.mxu0 0
    %225 = vmatpush1.bf16.msra.mxu0 0
    %226 = vmatprep.subr.bf16.mxu0 0
    %227 = vmatpush1.bf16.msra.mxu0 0
    %228 = vmatprep.subr.bf16.mxu0 0
    %229 = vmatpush1.bf16.msra.mxu0 0
    %230 = vmatprep.subr.bf16.mxu0 %v209
    %231 = vmatpush1.bf16.msra.mxu0 %v208
    %232 = vmatprep.subr.bf16.mxu0 0
    %233 = vmatpush2.bf16.msra.mxu0 0
    %234 = vmatprep.subr.bf16.mxu0 0
    %235 = vmatpush2.bf16.msra.mxu0 0
    %236 = vmatprep.subr.bf16.mxu0 0
    %237 = vmatpush2.bf16.msra.mxu0 0
    %238 = vmatprep.subr.bf16.mxu0 0
    %239 = vmatpush2.bf16.msra.mxu0 0
    %240 = vmatprep.subr.bf16.mxu0 0
    %241 = vmatpush2.bf16.msra.mxu0 0
    %242 = vmatprep.subr.bf16.mxu0 0
    %243 = vmatpush2.bf16.msra.mxu0 0
    %244 = vmatprep.subr.bf16.mxu0 0
    %245 = vmatpush2.bf16.msra.mxu0 0
    %246 = vmatprep.subr.bf16.mxu0 0
    %247 = vmatpush2.bf16.msra.mxu0 0
    %248 = vmatprep.mubr.bf16.mxu0 0
    %249 = vmatmul.mubr.bf16.gmra.mxu0 %v214
    %v250 = vpop.f32.mrf.mxu0
    %v251 = vadd.f32 %v194, %v250
    %v252 = vpop.f32.mrf.mxu0
    %v253 = vadd.f32 %v196, %v252
    %v254 = vpop.f32.mrf.mxu0
    %v255 = vadd.f32 %v198, %v254
    %v256 = vpop.f32.mrf.mxu0
    %v257 = vadd.f32 %v200, %v256
    %258 = vdwg.mxu0
    %v259 = vld [vmem:[#allocation7] sm:$0x3]
    %v261 = vlaneseq
    %v262 = vshrl.u32 %v261, 7
    %v263 = vsub.s32 0, %v262
    %v264 = vrot.slane %v259, %v263
    %v265 = vlaneseq
    %v266 = vshrl.u32 %v265, 7
    %v267 = vsub.s32 1, %v266
    %v268 = vrot.slane %v259, %v267
    %v271 = vadd.f32 %v251, %v264
    %v272 = vadd.f32 %v253, %v268
    %v273 = vadd.f32 %v255, %v264
    %v274 = vadd.f32 %v257, %v268
    %v275 = vmax.f32 %v271, 0.0
    %v276 = vmax.f32 %v272, 0.0
    %v277 = vmax.f32 %v273, 0.0
    %v278 = vmax.f32 %v274, 0.0
    %v279 = vpack.c.bf16 %v277, %v275
    %v280 = vpack.c.bf16 %v278, %v276
    %v281 = vld [vmem:[#allocation8] sm:$0xff]
    %v282 = vld [vmem:[#allocation8 + $0x8] sm:$0xff]
    %v283 = vld [vmem:[#allocation8 + $0x10] sm:$0xff]
    %v284 = vld [vmem:[#allocation8 + $0x18] sm:$0xff]
    %v285 = vld [vmem:[#allocation8 + $0x20] sm:$0xff]
    %v286 = vld [vmem:[#allocation8 + $0x28] sm:$0xff]
    %v287 = vld [vmem:[#allocation8 + $0x30] sm:$0xff]
    %v288 = vld [vmem:[#allocation8 + $0x38] sm:$0xff]
    %v289 = vld [vmem:[#allocation8 + $0x40] sm:$0xff]
    %v290 = vld [vmem:[#allocation8 + $0x48] sm:$0xff]
    %v291 = vld [vmem:[#allocation8 + $0x50] sm:$0xff]
    %v292 = vld [vmem:[#allocation8 + $0x58] sm:$0xff]
    %v293 = vld [vmem:[#allocation8 + $0x60] sm:$0xff]
    %v294 = vld [vmem:[#allocation8 + $0x68] sm:$0xff]
    %v295 = vld [vmem:[#allocation8 + $0x70] sm:$0xff]
    %v296 = vld [vmem:[#allocation8 + $0x78] sm:$0xff]
    %v297 = vld [vmem:[#allocation8 + $0x80] sm:$0xff]
    %v298 = vld [vmem:[#allocation8 + $0x88] sm:$0xff]
    %v299 = vld [vmem:[#allocation8 + $0x90] sm:$0xff]
    %v300 = vld [vmem:[#allocation8 + $0x98] sm:$0xff]
    %v301 = vld [vmem:[#allocation8 + $0xa0] sm:$0xff]
    %v302 = vld [vmem:[#allocation8 + $0xa8] sm:$0xff]
    %v303 = vld [vmem:[#allocation8 + $0xb0] sm:$0xff]
    %v304 = vld [vmem:[#allocation8 + $0xb8] sm:$0xff]
    %v305 = vld [vmem:[#allocation8 + $0xc0] sm:$0xff]
    %v306 = vld [vmem:[#allocation8 + $0xc8] sm:$0xff]
    %v307 = vld [vmem:[#allocation8 + $0xd0] sm:$0xff]
    %v308 = vld [vmem:[#allocation8 + $0xd8] sm:$0xff]
    %v309 = vld [vmem:[#allocation8 + $0xe0] sm:$0xff]
    %v310 = vld [vmem:[#allocation8 + $0xe8] sm:$0xff]
    %v311 = vld [vmem:[#allocation8 + $0xf0] sm:$0xff]
    %v312 = vld [vmem:[#allocation8 + $0xf8] sm:$0xff]
    %v313 = vld [vmem:[%s8] sm:$0x3]
    %v315 = vlaneseq
    %v316 = vshrl.u32 %v315, 7
    %v317 = vsub.s32 0, %v316
    %v318 = vrot.slane %v313, %v317
    %v319 = vlaneseq
    %v320 = vshrl.u32 %v319, 7
    %v321 = vsub.s32 1, %v320
    %v322 = vrot.slane %v313, %v321
    %v357 = vunpack.c.l.b16 %v281
    %v358 = vunpack.c.h.b16 %v281
    %v359 = vunpack.c.l.b16 %v282
    %v360 = vunpack.c.h.b16 %v282
    %v361 = vunpack.c.l.b16 %v283
    %v362 = vunpack.c.h.b16 %v283
    %v363 = vunpack.c.l.b16 %v284
    %v364 = vunpack.c.h.b16 %v284
    %v365 = vunpack.c.l.b16 %v285
    %v366 = vunpack.c.h.b16 %v285
    %v367 = vunpack.c.l.b16 %v286
    %v368 = vunpack.c.h.b16 %v286
    %v369 = vunpack.c.l.b16 %v287
    %v370 = vunpack.c.h.b16 %v287
    %v371 = vunpack.c.l.b16 %v288
    %v372 = vunpack.c.h.b16 %v288
    %v373 = vunpack.c.l.b16 %v289
    %v374 = vunpack.c.h.b16 %v289
    %v375 = vunpack.c.l.b16 %v290
    %v376 = vunpack.c.h.b16 %v290
    %v377 = vunpack.c.l.b16 %v291
    %v378 = vunpack.c.h.b16 %v291
    %v379 = vunpack.c.l.b16 %v292
    %v380 = vunpack.c.h.b16 %v292
    %v381 = vunpack.c.l.b16 %v293
    %v382 = vunpack.c.h.b16 %v293
    %v383 = vunpack.c.l.b16 %v294
    %v384 = vunpack.c.h.b16 %v294
    %v385 = vunpack.c.l.b16 %v295
    %v386 = vunpack.c.h.b16 %v295
    %v387 = vunpack.c.l.b16 %v296
    %v388 = vunpack.c.h.b16 %v296
    %v389 = vunpack.c.l.b16 %v297
    %v390 = vunpack.c.h.b16 %v297
    %v391 = vunpack.c.l.b16 %v298
    %v392 = vunpack.c.h.b16 %v298
    %v393 = vunpack.c.l.b16 %v299
    %v394 = vunpack.c.h.b16 %v299
    %v395 = vunpack.c.l.b16 %v300
    %v396 = vunpack.c.h.b16 %v300
    %v397 = vunpack.c.l.b16 %v301
    %v398 = vunpack.c.h.b16 %v301
    %v399 = vunpack.c.l.b16 %v302
    %v400 = vunpack.c.h.b16 %v302
    %v401 = vunpack.c.l.b16 %v303
    %v402 = vunpack.c.h.b16 %v303
    %v403 = vunpack.c.l.b16 %v304
    %v404 = vunpack.c.h.b16 %v304
    %v405 = vunpack.c.l.b16 %v305
    %v406 = vunpack.c.h.b16 %v305
    %v407 = vunpack.c.l.b16 %v306
    %v408 = vunpack.c.h.b16 %v306
    %v409 = vunpack.c.l.b16 %v307
    %v410 = vunpack.c.h.b16 %v307
    %v411 = vunpack.c.l.b16 %v308
    %v412 = vunpack.c.h.b16 %v308
    %v413 = vunpack.c.l.b16 %v309
    %v414 = vunpack.c.h.b16 %v309
    %v415 = vunpack.c.l.b16 %v310
    %v416 = vunpack.c.h.b16 %v310
    %v417 = vunpack.c.l.b16 %v311
    %v418 = vunpack.c.h.b16 %v311
    %v419 = vunpack.c.l.b16 %v312
    %v420 = vunpack.c.h.b16 %v312
    %v421 = vpack.c.b16 %v359, %v357
    %v422 = vpack.c.b16 %v360, %v358
    %v423 = vpack.c.b16 %v363, %v361
    %v424 = vpack.c.b16 %v364, %v362
    %v425 = vpack.c.b16 %v367, %v365
    %v426 = vpack.c.b16 %v368, %v366
    %v427 = vpack.c.b16 %v371, %v369
    %v428 = vpack.c.b16 %v372, %v370
    %v429 = vpack.c.b16 %v375, %v373
    %v430 = vpack.c.b16 %v376, %v374
    %v431 = vpack.c.b16 %v379, %v377
    %v432 = vpack.c.b16 %v380, %v378
    %v433 = vpack.c.b16 %v383, %v381
    %v434 = vpack.c.b16 %v384, %v382
    %v435 = vpack.c.b16 %v387, %v385
    %v436 = vpack.c.b16 %v388, %v386
    %v437 = vpack.c.b16 %v391, %v389
    %v438 = vpack.c.b16 %v392, %v390
    %v439 = vpack.c.b16 %v395, %v393
    %v440 = vpack.c.b16 %v396, %v394
    %v441 = vpack.c.b16 %v399, %v397
    %v442 = vpack.c.b16 %v400, %v398
    %v443 = vpack.c.b16 %v403, %v401
    %v444 = vpack.c.b16 %v404, %v402
    %v445 = vpack.c.b16 %v407, %v405
    %v446 = vpack.c.b16 %v408, %v406
    %v447 = vpack.c.b16 %v411, %v409
    %v448 = vpack.c.b16 %v412, %v410
    %v449 = vpack.c.b16 %v415, %v413
    %v450 = vpack.c.b16 %v416, %v414
    %v451 = vpack.c.b16 %v419, %v417
    %v452 = vpack.c.b16 %v420, %v418
    %485 = vmatprep.subr.bf16.mxu0 %v436
    %486 = vmatpush1.bf16.msra.mxu0 %v435
    %487 = vmatprep.subr.bf16.mxu0 %v434
    %488 = vmatpush1.bf16.msra.mxu0 %v433
    %489 = vmatprep.subr.bf16.mxu0 %v432
    %490 = vmatpush1.bf16.msra.mxu0 %v431
    %491 = vmatprep.subr.bf16.mxu0 %v430
    %492 = vmatpush1.bf16.msra.mxu0 %v429
    %493 = vmatprep.subr.bf16.mxu0 %v428
    %494 = vmatpush1.bf16.msra.mxu0 %v427
    %495 = vmatprep.subr.bf16.mxu0 %v426
    %496 = vmatpush1.bf16.msra.mxu0 %v425
    %497 = vmatprep.subr.bf16.mxu0 %v424
    %498 = vmatpush1.bf16.msra.mxu0 %v423
    %499 = vmatprep.subr.bf16.mxu0 %v422
    %500 = vmatpush1.bf16.msra.mxu0 %v421
    %501 = vmatprep.subr.bf16.mxu0 %v452
    %502 = vmatpush2.bf16.msra.mxu0 %v451
    %503 = vmatprep.subr.bf16.mxu0 %v450
    %504 = vmatpush2.bf16.msra.mxu0 %v449
    %505 = vmatprep.subr.bf16.mxu0 %v448
    %506 = vmatpush2.bf16.msra.mxu0 %v447
    %507 = vmatprep.subr.bf16.mxu0 %v446
    %508 = vmatpush2.bf16.msra.mxu0 %v445
    %509 = vmatprep.subr.bf16.mxu0 %v444
    %510 = vmatpush2.bf16.msra.mxu0 %v443
    %511 = vmatprep.subr.bf16.mxu0 %v442
    %512 = vmatpush2.bf16.msra.mxu0 %v441
    %513 = vmatprep.subr.bf16.mxu0 %v440
    %514 = vmatpush2.bf16.msra.mxu0 %v439
    %515 = vmatprep.subr.bf16.mxu0 %v438
    %516 = vmatpush2.bf16.msra.mxu0 %v437
    %517 = vmatprep.mubr.bf16.mxu0 %v280
    %518 = vmatmul.mubr.bf16.gmra.mxu0 %v279
    %v519 = vpop.f32.mrf.mxu0
    %v520 = vadd.f32 %v318, %v519
    %v521 = vpop.f32.mrf.mxu0
    %v522 = vadd.f32 %v322, %v521
    %v523 = vpop.f32.mrf.mxu0
    %v524 = vadd.f32 %v318, %v523
    %v525 = vpop.f32.mrf.mxu0
    %v526 = vadd.f32 %v322, %v525
    %527 = vdwg.mxu0
    %v528 = vmax.f32 %v520, 0.0
    %v529 = vmax.f32 %v522, 0.0
    %v530 = vmax.f32 %v524, 0.0
    %v531 = vmax.f32 %v526, 0.0
    %v532 = vpack.c.bf16 %v530, %v528
    %v533 = vpack.c.bf16 %v531, %v529
    %v534 = vld [vmem:[%s2] sm:$0xff]
    %v535 = vld [vmem:[%s2 + $0x8] sm:$0xff]
    %v536 = vpack.c.bf16 %v535, %v534
    %v537 = vld [vmem:[%s9] sm:$0xff]
    %v538 = vld [vmem:[%s9 + $0x8] sm:$0xff]
    %v539 = vld [vmem:[%s3] sm:$0xff]
    %v540 = vld [vmem:[%s3 + $0x8] sm:$0xff]
    %v541 = vpack.c.bf16 %v540, %v539
    %v542 = vld [vmem:[%s10] sm:$0xf]
    %v545 = vunpack.c.l.s4 1983009808
    %v546 = vunpack.c.0.s8 %v545
    %v547 = vlaneseq
    %v548 = vshrl.u32 %v547, 7
    %v549 = vsub.s32 %v546, %v548
    %v550 = vrot.slane %v542, %v549
    %v551 = vcombine.high %v550, %v550
    %v553 = vsel %vm148, %v541, 0
    %v556 = vsel %vm152, %v550, 0
    %v559 = vsel %vm152, %v551, 0
    %561 = vmatprep.subr.bf16.mxu0 0
    %562 = vmatpush1.bf16.msra.mxu0 0
    %563 = vmatprep.subr.bf16.mxu0 0
    %564 = vmatpush1.bf16.msra.mxu0 0
    %565 = vmatprep.subr.bf16.mxu0 0
    %566 = vmatpush1.bf16.msra.mxu0 0
    %567 = vmatprep.subr.bf16.mxu0 0
    %568 = vmatpush1.bf16.msra.mxu0 0
    %569 = vmatprep.subr.bf16.mxu0 0
    %570 = vmatpush1.bf16.msra.mxu0 0
    %571 = vmatprep.subr.bf16.mxu0 0
    %572 = vmatpush1.bf16.msra.mxu0 0
    %573 = vmatprep.subr.bf16.mxu0 0
    %574 = vmatpush1.bf16.msra.mxu0 0
    %575 = vmatprep.subr.bf16.mxu0 %v559
    %576 = vmatpush1.bf16.msra.mxu0 %v556
    %577 = vmatprep.subr.bf16.mxu0 0
    %578 = vmatpush2.bf16.msra.mxu0 0
    %579 = vmatprep.subr.bf16.mxu0 0
    %580 = vmatpush2.bf16.msra.mxu0 0
    %581 = vmatprep.subr.bf16.mxu0 0
    %582 = vmatpush2.bf16.msra.mxu0 0
    %583 = vmatprep.subr.bf16.mxu0 0
    %584 = vmatpush2.bf16.msra.mxu0 0
    %585 = vmatprep.subr.bf16.mxu0 0
    %586 = vmatpush2.bf16.msra.mxu0 0
    %587 = vmatprep.subr.bf16.mxu0 0
    %588 = vmatpush2.bf16.msra.mxu0 0
    %589 = vmatprep.subr.bf16.mxu0 0
    %590 = vmatpush2.bf16.msra.mxu0 0
    %591 = vmatprep.subr.bf16.mxu0 0
    %592 = vmatpush2.bf16.msra.mxu0 0
    %593 = vmatprep.mubr.bf16.mxu0 0
    %594 = vmatmul.mubr.bf16.gmra.mxu0 %v553
    %v595 = vpop.f32.mrf.mxu0
    %v596 = vadd.f32 0.0, %v595
    %v597 = vpop.f32.mrf.mxu0
    %v598 = vadd.f32 0.0, %v597
    %v599 = vpop.f32.mrf.mxu0
    %v600 = vadd.f32 0.0, %v599
    %v601 = vpop.f32.mrf.mxu0
    %v602 = vadd.f32 0.0, %v601
    %603 = vdwg.mxu0
    %v606 = vunpack.c.l.b16 %v537
    %v607 = vunpack.c.h.b16 %v537
    %v608 = vunpack.c.l.b16 %v538
    %v609 = vunpack.c.h.b16 %v538
    %v610 = vpack.c.b16 %v608, %v606
    %v611 = vpack.c.b16 %v609, %v607
    %v615 = vsel %vm212, %v536, 0
    %617 = vmatprep.subr.bf16.mxu0 0
    %618 = vmatpush1.bf16.msra.mxu0 0
    %619 = vmatprep.subr.bf16.mxu0 0
    %620 = vmatpush1.bf16.msra.mxu0 0
    %621 = vmatprep.subr.bf16.mxu0 0
    %622 = vmatpush1.bf16.msra.mxu0 0
    %623 = vmatprep.subr.bf16.mxu0 0
    %624 = vmatpush1.bf16.msra.mxu0 0
    %625 = vmatprep.subr.bf16.mxu0 0
    %626 = vmatpush1.bf16.msra.mxu0 0
    %627 = vmatprep.subr.bf16.mxu0 0
    %628 = vmatpush1.bf16.msra.mxu0 0
    %629 = vmatprep.subr.bf16.mxu0 0
    %630 = vmatpush1.bf16.msra.mxu0 0
    %631 = vmatprep.subr.bf16.mxu0 %v611
    %632 = vmatpush1.bf16.msra.mxu0 %v610
    %633 = vmatprep.subr.bf16.mxu0 0
    %634 = vmatpush2.bf16.msra.mxu0 0
    %635 = vmatprep.subr.bf16.mxu0 0
    %636 = vmatpush2.bf16.msra.mxu0 0
    %637 = vmatprep.subr.bf16.mxu0 0
    %638 = vmatpush2.bf16.msra.mxu0 0
    %639 = vmatprep.subr.bf16.mxu0 0
    %640 = vmatpush2.bf16.msra.mxu0 0
    %641 = vmatprep.subr.bf16.mxu0 0
    %642 = vmatpush2.bf16.msra.mxu0 0
    %643 = vmatprep.subr.bf16.mxu0 0
    %644 = vmatpush2.bf16.msra.mxu0 0
    %645 = vmatprep.subr.bf16.mxu0 0
    %646 = vmatpush2.bf16.msra.mxu0 0
    %647 = vmatprep.subr.bf16.mxu0 0
    %648 = vmatpush2.bf16.msra.mxu0 0
    %649 = vmatprep.mubr.bf16.mxu0 0
    %650 = vmatmul.mubr.bf16.gmra.mxu0 %v615
    %v651 = vpop.f32.mrf.mxu0
    %v652 = vadd.f32 %v596, %v651
    %v653 = vpop.f32.mrf.mxu0
    %v654 = vadd.f32 %v598, %v653
    %v655 = vpop.f32.mrf.mxu0
    %v656 = vadd.f32 %v600, %v655
    %v657 = vpop.f32.mrf.mxu0
    %v658 = vadd.f32 %v602, %v657
    %659 = vdwg.mxu0
    %v660 = vld [vmem:[%s11] sm:$0x3]
    %v662 = vlaneseq
    %v663 = vshrl.u32 %v662, 7
    %v664 = vsub.s32 0, %v663
    %v665 = vrot.slane %v660, %v664
    %v666 = vlaneseq
    %v667 = vshrl.u32 %v666, 7
    %v668 = vsub.s32 1, %v667
    %v669 = vrot.slane %v660, %v668
    %v672 = vadd.f32 %v652, %v665
    %v673 = vadd.f32 %v654, %v669
    %v674 = vadd.f32 %v656, %v665
    %v675 = vadd.f32 %v658, %v669
    %v676 = vmax.f32 %v672, 0.0
    %v677 = vmax.f32 %v673, 0.0
    %v678 = vmax.f32 %v674, 0.0
    %v679 = vmax.f32 %v675, 0.0
    %v680 = vpack.c.bf16 %v678, %v676
    %v681 = vpack.c.bf16 %v679, %v677
    %v682 = vld [vmem:[#allocation10] sm:$0xf]
    %v683 = vld [vmem:[#allocation10 + $0x4] sm:$0xf]
    %v684 = vld [vmem:[#allocation10 + $0x8] sm:$0xf]
    %v685 = vld [vmem:[#allocation10 + $0xc] sm:$0xf]
    %v686 = vld [vmem:[#allocation10 + $0x10] sm:$0xf]
    %v687 = vld [vmem:[#allocation10 + $0x14] sm:$0xf]
    %v688 = vld [vmem:[#allocation10 + $0x18] sm:$0xf]
    %v689 = vld [vmem:[#allocation10 + $0x1c] sm:$0xf]
    %v690 = vld [vmem:[#allocation10 + $0x20] sm:$0xf]
    %v691 = vld [vmem:[#allocation10 + $0x24] sm:$0xf]
    %v692 = vld [vmem:[#allocation10 + $0x28] sm:$0xf]
    %v693 = vld [vmem:[#allocation10 + $0x2c] sm:$0xf]
    %v694 = vld [vmem:[#allocation10 + $0x30] sm:$0xf]
    %v695 = vld [vmem:[#allocation10 + $0x34] sm:$0xf]
    %v696 = vld [vmem:[#allocation10 + $0x38] sm:$0xf]
    %v697 = vld [vmem:[#allocation10 + $0x3c] sm:$0xf]
    %v698 = vld [vmem:[#allocation10 + $0x40] sm:$0xf]
    %v699 = vld [vmem:[#allocation10 + $0x44] sm:$0xf]
    %v700 = vld [vmem:[#allocation10 + $0x48] sm:$0xf]
    %v701 = vld [vmem:[#allocation10 + $0x4c] sm:$0xf]
    %v702 = vld [vmem:[#allocation10 + $0x50] sm:$0xf]
    %v703 = vld [vmem:[#allocation10 + $0x54] sm:$0xf]
    %v704 = vld [vmem:[#allocation10 + $0x58] sm:$0xf]
    %v705 = vld [vmem:[#allocation10 + $0x5c] sm:$0xf]
    %v706 = vld [vmem:[#allocation10 + $0x60] sm:$0xf]
    %v707 = vld [vmem:[#allocation10 + $0x64] sm:$0xf]
    %v708 = vld [vmem:[#allocation10 + $0x68] sm:$0xf]
    %v709 = vld [vmem:[#allocation10 + $0x6c] sm:$0xf]
    %v710 = vld [vmem:[#allocation10 + $0x70] sm:$0xf]
    %v711 = vld [vmem:[#allocation10 + $0x74] sm:$0xf]
    %v712 = vld [vmem:[#allocation10 + $0x78] sm:$0xf]
    %v713 = vld [vmem:[#allocation10 + $0x7c] sm:$0xf]
    %v714 = vld [vmem:[#allocation11] sm:$0xf]
    %v715 = vld [vmem:[#allocation11 + $0x4] sm:$0xf]
    %v716 = vld [vmem:[#allocation11 + $0x8] sm:$0xf]
    %v717 = vld [vmem:[#allocation11 + $0xc] sm:$0xf]
    %v718 = vld [vmem:[#allocation11 + $0x10] sm:$0xf]
    %v719 = vld [vmem:[#allocation11 + $0x14] sm:$0xf]
    %v720 = vld [vmem:[#allocation11 + $0x18] sm:$0xf]
    %v721 = vld [vmem:[#allocation11 + $0x1c] sm:$0xf]
    %v722 = vld [vmem:[#allocation11 + $0x20] sm:$0xf]
    %v723 = vld [vmem:[#allocation11 + $0x24] sm:$0xf]
    %v724 = vld [vmem:[#allocation11 + $0x28] sm:$0xf]
    %v725 = vld [vmem:[#allocation11 + $0x2c] sm:$0xf]
    %v726 = vld [vmem:[#allocation11 + $0x30] sm:$0xf]
    %v727 = vld [vmem:[#allocation11 + $0x34] sm:$0xf]
    %v728 = vld [vmem:[#allocation11 + $0x38] sm:$0xf]
    %v729 = vld [vmem:[#allocation11 + $0x3c] sm:$0xf]
    %v730 = vld [vmem:[#allocation11 + $0x40] sm:$0xf]
    %v731 = vld [vmem:[#allocation11 + $0x44] sm:$0xf]
    %v732 = vld [vmem:[#allocation11 + $0x48] sm:$0xf]
    %v733 = vld [vmem:[#allocation11 + $0x4c] sm:$0xf]
    %v734 = vld [vmem:[#allocation11 + $0x50] sm:$0xf]
    %v735 = vld [vmem:[#allocation11 + $0x54] sm:$0xf]
    %v736 = vld [vmem:[#allocation11 + $0x58] sm:$0xf]
    %v737 = vld [vmem:[#allocation11 + $0x5c] sm:$0xf]
    %v738 = vld [vmem:[#allocation11 + $0x60] sm:$0xf]
    %v739 = vld [vmem:[#allocation11 + $0x64] sm:$0xf]
    %v740 = vld [vmem:[#allocation11 + $0x68] sm:$0xf]
    %v741 = vld [vmem:[#allocation11 + $0x6c] sm:$0xf]
    %v742 = vld [vmem:[#allocation11 + $0x70] sm:$0xf]
    %v743 = vld [vmem:[#allocation11 + $0x74] sm:$0xf]
    %v744 = vld [vmem:[#allocation11 + $0x78] sm:$0xf]
    %v745 = vld [vmem:[#allocation11 + $0x7c] sm:$0xf]
    %v778 = vunpack.c.l.b16 %v714
    %v779 = vunpack.c.l.b16 %v715
    %v780 = vunpack.c.l.b16 %v716
    %v781 = vunpack.c.l.b16 %v717
    %v782 = vunpack.c.l.b16 %v718
    %v783 = vunpack.c.l.b16 %v719
    %v784 = vunpack.c.l.b16 %v720
    %v785 = vunpack.c.l.b16 %v721
    %v786 = vunpack.c.l.b16 %v722
    %v787 = vunpack.c.l.b16 %v723
    %v788 = vunpack.c.l.b16 %v724
    %v789 = vunpack.c.l.b16 %v725
    %v790 = vunpack.c.l.b16 %v726
    %v791 = vunpack.c.l.b16 %v727
    %v792 = vunpack.c.l.b16 %v728
    %v793 = vunpack.c.l.b16 %v729
    %v794 = vunpack.c.l.b16 %v730
    %v795 = vunpack.c.l.b16 %v731
    %v796 = vunpack.c.l.b16 %v732
    %v797 = vunpack.c.l.b16 %v733
    %v798 = vunpack.c.l.b16 %v734
    %v799 = vunpack.c.l.b16 %v735
    %v800 = vunpack.c.l.b16 %v736
    %v801 = vunpack.c.l.b16 %v737
    %v802 = vunpack.c.l.b16 %v738
    %v803 = vunpack.c.l.b16 %v739
    %v804 = vunpack.c.l.b16 %v740
    %v805 = vunpack.c.l.b16 %v741
    %v806 = vunpack.c.l.b16 %v742
    %v807 = vunpack.c.l.b16 %v743
    %v808 = vunpack.c.l.b16 %v744
    %v809 = vunpack.c.l.b16 %v745
    %v810 = vpack.c.b16 %v779, %v778
    %v811 = vpack.c.b16 %v781, %v780
    %v812 = vpack.c.b16 %v783, %v782
    %v813 = vpack.c.b16 %v785, %v784
    %v814 = vpack.c.b16 %v787, %v786
    %v815 = vpack.c.b16 %v789, %v788
    %v816 = vpack.c.b16 %v791, %v790
    %v817 = vpack.c.b16 %v793, %v792
    %v818 = vpack.c.b16 %v795, %v794
    %v819 = vpack.c.b16 %v797, %v796
    %v820 = vpack.c.b16 %v799, %v798
    %v821 = vpack.c.b16 %v801, %v800
    %v822 = vpack.c.b16 %v803, %v802
    %v823 = vpack.c.b16 %v805, %v804
    %v824 = vpack.c.b16 %v807, %v806
    %v825 = vpack.c.b16 %v809, %v808
    %842 = vmatprep.subr.bf16.mxu0 0
    %843 = vmatpush1.bf16.msra.mxu0 %v817
    %844 = vmatprep.subr.bf16.mxu0 0
    %845 = vmatpush1.bf16.msra.mxu0 %v816
    %846 = vmatprep.subr.bf16.mxu0 0
    %847 = vmatpush1.bf16.msra.mxu0 %v815
    %848 = vmatprep.subr.bf16.mxu0 0
    %849 = vmatpush1.bf16.msra.mxu0 %v814
    %850 = vmatprep.subr.bf16.mxu0 0
    %851 = vmatpush1.bf16.msra.mxu0 %v813
    %852 = vmatprep.subr.bf16.mxu0 0
    %853 = vmatpush1.bf16.msra.mxu0 %v812
    %854 = vmatprep.subr.bf16.mxu0 0
    %855 = vmatpush1.bf16.msra.mxu0 %v811
    %856 = vmatprep.subr.bf16.mxu0 0
    %857 = vmatpush1.bf16.msra.mxu0 %v810
    %858 = vmatprep.subr.bf16.mxu0 0
    %859 = vmatpush2.bf16.msra.mxu0 %v825
    %860 = vmatprep.subr.bf16.mxu0 0
    %861 = vmatpush2.bf16.msra.mxu0 %v824
    %862 = vmatprep.subr.bf16.mxu0 0
    %863 = vmatpush2.bf16.msra.mxu0 %v823
    %864 = vmatprep.subr.bf16.mxu0 0
    %865 = vmatpush2.bf16.msra.mxu0 %v822
    %866 = vmatprep.subr.bf16.mxu0 0
    %867 = vmatpush2.bf16.msra.mxu0 %v821
    %868 = vmatprep.subr.bf16.mxu0 0
    %869 = vmatpush2.bf16.msra.mxu0 %v820
    %870 = vmatprep.subr.bf16.mxu0 0
    %871 = vmatpush2.bf16.msra.mxu0 %v819
    %872 = vmatprep.subr.bf16.mxu0 0
    %873 = vmatpush2.bf16.msra.mxu0 %v818
    %874 = vmatprep.mubr.bf16.mxu0 %v681
    %875 = vmatmul.mubr.bf16.gmra.mxu0 %v680
    %v876 = vpop.f32.mrf.mxu0
    %v877 = vadd.f32 0.0, %v876
    %v878 = vpop.f32.mrf.mxu0
    %v879 = vpop.f32.mrf.mxu0
    %v880 = vadd.f32 0.0, %v879
    %v881 = vpop.f32.mrf.mxu0
    %882 = vdwg.mxu0
    %v915 = vunpack.c.l.b16 %v682
    %v916 = vunpack.c.l.b16 %v683
    %v917 = vunpack.c.l.b16 %v684
    %v918 = vunpack.c.l.b16 %v685
    %v919 = vunpack.c.l.b16 %v686
    %v920 = vunpack.c.l.b16 %v687
    %v921 = vunpack.c.l.b16 %v688
    %v922 = vunpack.c.l.b16 %v689
    %v923 = vunpack.c.l.b16 %v690
    %v924 = vunpack.c.l.b16 %v691
    %v925 = vunpack.c.l.b16 %v692
    %v926 = vunpack.c.l.b16 %v693
    %v927 = vunpack.c.l.b16 %v694
    %v928 = vunpack.c.l.b16 %v695
    %v929 = vunpack.c.l.b16 %v696
    %v930 = vunpack.c.l.b16 %v697
    %v931 = vunpack.c.l.b16 %v698
    %v932 = vunpack.c.l.b16 %v699
    %v933 = vunpack.c.l.b16 %v700
    %v934 = vunpack.c.l.b16 %v701
    %v935 = vunpack.c.l.b16 %v702
    %v936 = vunpack.c.l.b16 %v703
    %v937 = vunpack.c.l.b16 %v704
    %v938 = vunpack.c.l.b16 %v705
    %v939 = vunpack.c.l.b16 %v706
    %v940 = vunpack.c.l.b16 %v707
    %v941 = vunpack.c.l.b16 %v708
    %v942 = vunpack.c.l.b16 %v709
    %v943 = vunpack.c.l.b16 %v710
    %v944 = vunpack.c.l.b16 %v711
    %v945 = vunpack.c.l.b16 %v712
    %v946 = vunpack.c.l.b16 %v713
    %v947 = vpack.c.b16 %v916, %v915
    %v948 = vpack.c.b16 %v918, %v917
    %v949 = vpack.c.b16 %v920, %v919
    %v950 = vpack.c.b16 %v922, %v921
    %v951 = vpack.c.b16 %v924, %v923
    %v952 = vpack.c.b16 %v926, %v925
    %v953 = vpack.c.b16 %v928, %v927
    %v954 = vpack.c.b16 %v930, %v929
    %v955 = vpack.c.b16 %v932, %v931
    %v956 = vpack.c.b16 %v934, %v933
    %v957 = vpack.c.b16 %v936, %v935
    %v958 = vpack.c.b16 %v938, %v937
    %v959 = vpack.c.b16 %v940, %v939
    %v960 = vpack.c.b16 %v942, %v941
    %v961 = vpack.c.b16 %v944, %v943
    %v962 = vpack.c.b16 %v946, %v945
    %979 = vmatprep.subr.bf16.mxu0 0
    %980 = vmatpush1.bf16.msra.mxu0 %v954
    %981 = vmatprep.subr.bf16.mxu0 0
    %982 = vmatpush1.bf16.msra.mxu0 %v953
    %983 = vmatprep.subr.bf16.mxu0 0
    %984 = vmatpush1.bf16.msra.mxu0 %v952
    %985 = vmatprep.subr.bf16.mxu0 0
    %986 = vmatpush1.bf16.msra.mxu0 %v951
    %987 = vmatprep.subr.bf16.mxu0 0
    %988 = vmatpush1.bf16.msra.mxu0 %v950
    %989 = vmatprep.subr.bf16.mxu0 0
    %990 = vmatpush1.bf16.msra.mxu0 %v949
    %991 = vmatprep.subr.bf16.mxu0 0
    %992 = vmatpush1.bf16.msra.mxu0 %v948
    %993 = vmatprep.subr.bf16.mxu0 0
    %994 = vmatpush1.bf16.msra.mxu0 %v947
    %995 = vmatprep.subr.bf16.mxu0 0
    %996 = vmatpush2.bf16.msra.mxu0 %v962
    %997 = vmatprep.subr.bf16.mxu0 0
    %998 = vmatpush2.bf16.msra.mxu0 %v961
    %999 = vmatprep.subr.bf16.mxu0 0
    %1000 = vmatpush2.bf16.msra.mxu0 %v960
    %1001 = vmatprep.subr.bf16.mxu0 0
    %1002 = vmatpush2.bf16.msra.mxu0 %v959
    %1003 = vmatprep.subr.bf16.mxu0 0
    %1004 = vmatpush2.bf16.msra.mxu0 %v958
    %1005 = vmatprep.subr.bf16.mxu0 0
    %1006 = vmatpush2.bf16.msra.mxu0 %v957
    %1007 = vmatprep.subr.bf16.mxu0 0
    %1008 = vmatpush2.bf16.msra.mxu0 %v956
    %1009 = vmatprep.subr.bf16.mxu0 0
    %1010 = vmatpush2.bf16.msra.mxu0 %v955
    %1011 = vmatprep.mubr.bf16.mxu0 %v533
    %1012 = vmatmul.mubr.bf16.gmra.mxu0 %v532
    %v1013 = vpop.f32.mrf.mxu0
    %v1014 = vadd.f32 %v877, %v1013
    %v1015 = vpop.f32.mrf.mxu0
    %v1016 = vpop.f32.mrf.mxu0
    %v1017 = vadd.f32 %v880, %v1016
    %v1018 = vpop.f32.mrf.mxu0
    %1019 = vdwg.mxu0
    %v1020 = vld [vmem:[%s14] sm:$0x1]
    %v1022 = vlaneseq
    %v1023 = vshrl.u32 %v1022, 7
    %v1024 = vsub.s32 0, %v1023
    %v1025 = vrot.slane %v1020, %v1024
    %v1027 = vadd.f32 %v1014, %v1025
    %v1028 = vadd.f32 %v1017, %v1025
    %1029 = vst [vmem:[#allocation13] sm:$0xff] %v1027
    %1030 = vst [vmem:[#allocation13 + $0x8] sm:$0xff] %v1028
    // Predicated region
    $region86: #{tpu_custom_call.1} parent=1 // pred_check
      _
    $region87: #{tpu_custom_call.1} parent=1 // pred_check_branch
      %1032 = sbr.rel (0) target = $region89
    $region88: #{tpu_custom_call.1} parent=1 // pred_region
      %s1034 = ssub.s32 256, 256
      %1035 = vsyncadd [#allocation4], %s1034
      %s1036 = sshll.u32 [#allocation13], 4
      %s1037 = int_to_ptr.vmem [resolvable:$true] %s1036
      %1042 = dma.vmem_to_hbm [thread:$0]  %s1037, 256, %s15, [#allocation4], 128, 128, 8
    $region89: #{tpu_custom_call.1} parent=1 // pred_fallthru
      _
    // Predicated region
    $region90: #{tpu_custom_call.1} parent=1 // pred_check
      _
    $region91: #{tpu_custom_call.1} parent=1 // pred_check_branch
      %1044 = sbr.rel (0) target = $region93
    $region92: #{tpu_custom_call.1} parent=1 // pred_region
      %1045 = dma.done [#allocation4], 256
    $region93: #{tpu_custom_call.1} parent=1 // pred_fallthru
      _
    %1046 = vsyncpa [#allocation3], 1
    %1047 = vsyncpa [#allocation6], 1
    %1048 = vsyncpa [#allocation9], 1
    %1049 = vsyncpa [#allocation12], 1
    %1050 = vsyncpa [#allocation4], 1

</llo_original>
